<compile_context>
chip_gen: v7x
topology: tpu7x:2x2x1
jax: 0.10.0
libtpu: 0.0.40
codegen_flags: <defaults>
</compile_context>

<pallas_src>
import functools

import jax
import jax.numpy as jnp
from jax.experimental import pallas as pl
from jax.experimental.pallas import tpu as pltpu

LANE = 128
SUBLANE = 8


def _round_up(n: int, m: int) -> int:
    return ((n + m - 1) // m) * m


def ae_kernel(x_ref,
              w1_ref, b1_ref, w2_ref, b2_ref, w3_ref, b3_ref,
              w4_ref, b4_ref, w5_ref, b5_ref, w6_ref, b6_ref,
              out_ref, *, input_pad):
    """Fused Encoder+Decoder.  Weights are already in the compute dtype (pre-cast
    outside the kernel); only the activation is cast per matmul.  Accumulation f32."""

    def mm(a, w_ref):
        w = w_ref[...]                      # resident, already in compute dtype
        return jnp.dot(a.astype(w.dtype), w, preferred_element_type=jnp.float32)

    x = x_ref[...]

    # ---- Encoder ----  (self.LeakyReLU is nn.ReLU())
    h = jnp.maximum(mm(x, w1_ref) + b1_ref[...], 0.0)
    h = jnp.maximum(mm(h, w2_ref) + b2_ref[...], 0.0)
    z = mm(h, w3_ref) + b3_ref[...]

    # ---- Decoder ----
    h = jnp.maximum(mm(z, w4_ref) + b4_ref[...], 0.0)
    h = jnp.maximum(mm(h, w5_ref) + b5_ref[...], 0.0)
    x_hat = mm(h, w6_ref) + b6_ref[...]

    # Fused lane-dense output slab: [ x_hat | z ]  (both halves 128-lane aligned).
    out_ref[:, :input_pad] = x_hat.astype(out_ref.dtype)
    out_ref[:, input_pad:] = z.astype(out_ref.dtype)


def prepare_params(params, *, compute_dtype=jnp.float32):
    """Zero-pad every feature dim up to a multiple of 128 lanes and cast the six
    weight matrices (not the biases) to `compute_dtype` once, outside the kernel.
    Zero padding is exact: padded input lanes contribute 0 and padded bias lanes are 0."""
    input_dim, hidden_dim = params["w1"].shape
    latent_dim = params["w3"].shape[1]
    ip = _round_up(input_dim, LANE)
    hp = _round_up(hidden_dim, LANE)
    lp = _round_up(latent_dim, LANE)

    def pad(a, rows, cols):
        return jnp.pad(a, ((0, rows - a.shape[0]), (0, cols - a.shape[1])))

    prep = {
        "w1": pad(params["w1"], ip, hp).astype(compute_dtype), "b1": pad(params["b1"], 1, hp),
        "w2": pad(params["w2"], hp, hp).astype(compute_dtype), "b2": pad(params["b2"], 1, hp),
        "w3": pad(params["w3"], hp, lp).astype(compute_dtype), "b3": pad(params["b3"], 1, lp),
        "w4": pad(params["w4"], lp, hp).astype(compute_dtype), "b4": pad(params["b4"], 1, hp),
        "w5": pad(params["w5"], hp, hp).astype(compute_dtype), "b5": pad(params["b5"], 1, hp),
        "w6": pad(params["w6"], hp, ip).astype(compute_dtype), "b6": pad(params["b6"], 1, ip),
    }
    dims = {"input_dim": input_dim, "hidden_dim": hidden_dim, "latent_dim": latent_dim,
            "input_pad": ip, "hidden_pad": hp, "latent_pad": lp}
    return prep, dims


def ae_forward(x, prep, dims, *, tile_m=1024, out_dtype=jnp.float32):
    """x: (batch, input_dim) f32.  prep/dims: from prepare_params.

    tile_m: batch rows per grid step.  1024-2048 is a good default on all of
    v5e/v6e/v7x (the kernel is HBM-bound; bigger tiles amortize per-step overhead).
    compute dtype is taken from the prepared weights (bf16 is fine on v5e too when
    exact f32 matmul is not required).  out_dtype=bf16 halves output HBM traffic."""
    batch, input_dim = x.shape
    assert input_dim == dims["input_dim"]
    ip, hp, lp = dims["input_pad"], dims["hidden_pad"], dims["latent_pad"]
    latent_dim = dims["latent_dim"]

    # ---- Batch tile selection ----
    min_padded = _round_up(batch, SUBLANE)
    tm = _round_up(min(tile_m, min_padded), SUBLANE)
    # v7x: batch axis is "parallel"; make sure the grid has >= 2 steps so both
    # TensorCores get work.  (v5e/v6e single-TC: one extra ~0.35us step, negligible.)
    if min_padded // tm < 2 and min_padded >= 2 * SUBLANE:
        tm = _round_up(pl.cdiv(min_padded, 2), SUBLANE)
    padded = _round_up(batch, tm)
    grid = (padded // tm,)

    # Pad x: batch -> padded rows, features -> lane-dense ip columns (zeros).
    x_p = jnp.pad(x, ((0, padded - batch), (0, ip - input_dim)))

    weight_args = (prep["w1"], prep["b1"], prep["w2"], prep["b2"],
                   prep["w3"], prep["b3"], prep["w4"], prep["b4"],
                   prep["w5"], prep["b5"], prep["w6"], prep["b6"])

    # ---- VMEM residency budget (weights stay resident across the whole grid) ----
    param_bytes = sum(int(a.size) * jnp.dtype(a.dtype).itemsize for a in weight_args)
    x_block_bytes = tm * ip * jnp.dtype(x_p.dtype).itemsize
    out_block_bytes = tm * (ip + lp) * jnp.dtype(out_dtype).itemsize
    resident_bytes = param_bytes + 2 * x_block_bytes + 2 * out_block_bytes
    if resident_bytes > 48 * 1024 * 1024:
        # TODO(synk): for very wide layers, split hidden_dim over an extra K/N grid
        # axis (or store weights in bf16) instead of keeping everything resident.
        raise ValueError(
            f"Resident params + tiles = {resident_bytes / 2**20:.1f} MiB exceeds the "
            "v7x 64 MiB VMEM headroom; shrink tile_m, use bf16 weights, or tile K/N.")

    # ---- BlockSpecs ----
    # x and the fused [x_hat | z] slab are tiled along batch; last dims are 128-multiples.
    x_spec = pl.BlockSpec((tm, ip), lambda i: (i, 0))
    out_spec = pl.BlockSpec((tm, ip + lp), lambda i: (i, 0))
    # Weights & biases: constant block index -> DMA'd once, VMEM-resident; single-buffered.
    try:
        weight_specs = [
            pl.BlockSpec(a.shape, lambda i: (0, 0), pipeline_mode=pl.Buffered(1))
            for a in weight_args
        ]
    except TypeError:  # older jax without pipeline_mode kwarg
        weight_specs = [pl.BlockSpec(a.shape, lambda i: (0, 0)) for a in weight_args]

    # ---- Advisory cost estimate (padded dims, true byte widths) ----
    flops = 2 * padded * (ip * hp + hp * hp + hp * lp + lp * hp + hp * hp + hp * ip)
    bytes_accessed = (padded * ip * jnp.dtype(x_p.dtype).itemsize
                      + param_bytes
                      + padded * (ip + lp) * jnp.dtype(out_dtype).itemsize)
    cost = pl.CostEstimate(flops=flops, transcendentals=0, bytes_accessed=bytes_accessed)

    vmem_limit = int(min(max(2 * resident_bytes, 32 * 2**20), 64 * 2**20))

    fused = pl.pallas_call(
        functools.partial(ae_kernel, input_pad=ip),
        out_shape=jax.ShapeDtypeStruct((padded, ip + lp), out_dtype),
        grid=grid,
        in_specs=[x_spec] + weight_specs,
        out_specs=out_spec,
        compiler_params=pltpu.CompilerParams(
            dimension_semantics=("parallel",),
            vmem_limit_bytes=vmem_limit),
        cost_estimate=cost,
    )(x_p, *weight_args)

    x_hat = fused[:batch, :input_dim]
    z = fused[:batch, ip:ip + latent_dim]
    return x_hat, z


def init_params(key, input_dim, hidden_dim, latent_dim):
    """Deterministic synthetic parameters (shapes mirror the nn.Linear layers)."""
    dims = [
        ("w1", (input_dim, hidden_dim)), ("b1", (1, hidden_dim)),
        ("w2", (hidden_dim, hidden_dim)), ("b2", (1, hidden_dim)),
        ("w3", (hidden_dim, latent_dim)), ("b3", (1, latent_dim)),
        ("w4", (latent_dim, hidden_dim)), ("b4", (1, hidden_dim)),
        ("w5", (hidden_dim, hidden_dim)), ("b5", (1, hidden_dim)),
        ("w6", (hidden_dim, input_dim)), ("b6", (1, input_dim)),
    ]
    params = {}
    keys = jax.random.split(key, len(dims))
    for k, (name, shape) in zip(keys, dims):
        params[name] = (0.02 * jax.random.normal(k, shape)).astype(jnp.float32)
    return params


def ae_reference(x, p, compute_dtype=jnp.float32):
    """Pure-JAX reference mirroring the kernel's operand dtype / f32 accumulation."""
    def mm(a, w):
        return jnp.dot(a.astype(compute_dtype), w.astype(compute_dtype),
                       preferred_element_type=jnp.float32)

    h = jnp.maximum(mm(x, p["w1"]) + p["b1"], 0.0)
    h = jnp.maximum(mm(h, p["w2"]) + p["b2"], 0.0)
    z = mm(h, p["w3"]) + p["b3"]
    h = jnp.maximum(mm(z, p["w4"]) + p["b4"], 0.0)
    h = jnp.maximum(mm(h, p["w5"]) + p["b5"], 0.0)
    x_hat = mm(h, p["w6"]) + p["b6"]
    return x_hat, z


if __name__ == "__main__":
    batch, input_dim, hidden_dim, latent_dim = 16, 64, 32, 16

    key = jax.random.PRNGKey(0)
    k_x, k_p = jax.random.split(key)
    x = jax.random.normal(k_x, (batch, input_dim), dtype=jnp.float32)
    params = init_params(k_p, input_dim, hidden_dim, latent_dim)

    # f32-operand, f32-output path (exact).  Lane-dense padded tiles, 2-step batch grid.
    prep32, dims32 = prepare_params(params, compute_dtype=jnp.float32)
    x_hat, z = ae_forward(x, prep32, dims32, tile_m=1024, out_dtype=jnp.float32)
    jax.block_until_ready((x_hat, z))
    x_hat_ref, z_ref = ae_reference(x, params, compute_dtype=jnp.float32)
    assert x_hat.shape == (batch, input_dim) and z.shape == (batch, latent_dim)
    assert jnp.allclose(x_hat, x_hat_ref, atol=1e-5, rtol=1e-5)
    assert jnp.allclose(z, z_ref, atol=1e-5, rtol=1e-5)

    # bf16-operand / bf16-output path (MXU-native on v5e/v6e/v7x, halves output traffic).
    prep16, dims16 = prepare_params(params, compute_dtype=jnp.bfloat16)
    x_hat16, z16 = ae_forward(x, prep16, dims16, tile_m=1024, out_dtype=jnp.bfloat16)
    jax.block_until_ready((x_hat16, z16))
    x_hat16_ref, z16_ref = ae_reference(x, params, compute_dtype=jnp.bfloat16)
    assert jnp.allclose(x_hat16.astype(jnp.float32), x_hat16_ref, atol=5e-3, rtol=5e-2)
    assert jnp.allclose(z16.astype(jnp.float32), z16_ref, atol=5e-3, rtol=5e-2)

    print("KERNEL_OK")
</pallas_src>

<mosaic_0001>
module attributes {stable_mosaic.version = 11 : i64} {
  func.func @ae_kernel(%arg0: i32, %arg1: memref<8x128xf32, #tpu.memory_space<vmem>>, %arg2: memref<128x128xf32, #tpu.memory_space<vmem>>, %arg3: memref<1x128xf32, #tpu.memory_space<vmem>>, %arg4: memref<128x128xf32, #tpu.memory_space<vmem>>, %arg5: memref<1x128xf32, #tpu.memory_space<vmem>>, %arg6: memref<128x128xf32, #tpu.memory_space<vmem>>, %arg7: memref<1x128xf32, #tpu.memory_space<vmem>>, %arg8: memref<128x128xf32, #tpu.memory_space<vmem>>, %arg9: memref<1x128xf32, #tpu.memory_space<vmem>>, %arg10: memref<128x128xf32, #tpu.memory_space<vmem>>, %arg11: memref<1x128xf32, #tpu.memory_space<vmem>>, %arg12: memref<128x128xf32, #tpu.memory_space<vmem>>, %arg13: memref<1x128xf32, #tpu.memory_space<vmem>>, %arg14: memref<8x256xf32, #tpu.memory_space<vmem>>) attributes {dimension_semantics = [#tpu.dimension_semantics<parallel>], iteration_bounds = array<i64: 2>, scalar_prefetch = 0 : i64, scratch_operands = 0 : i64, tpu.core_type = #tpu.core_type<tc>, window_params = [{transform_indices = @transform_0, window_bounds = array<i64: 8, 128>}, {pipeline_mode = #tpu.pipeline_mode<synchronous>, transform_indices = @transform_1, window_bounds = array<i64: 128, 128>}, {pipeline_mode = #tpu.pipeline_mode<synchronous>, transform_indices = @transform_2, window_bounds = array<i64: 1, 128>}, {pipeline_mode = #tpu.pipeline_mode<synchronous>, transform_indices = @transform_3, window_bounds = array<i64: 128, 128>}, {pipeline_mode = #tpu.pipeline_mode<synchronous>, transform_indices = @transform_4, window_bounds = array<i64: 1, 128>}, {pipeline_mode = #tpu.pipeline_mode<synchronous>, transform_indices = @transform_5, window_bounds = array<i64: 128, 128>}, {pipeline_mode = #tpu.pipeline_mode<synchronous>, transform_indices = @transform_6, window_bounds = array<i64: 1, 128>}, {pipeline_mode = #tpu.pipeline_mode<synchronous>, transform_indices = @transform_7, window_bounds = array<i64: 128, 128>}, {pipeline_mode = #tpu.pipeline_mode<synchronous>, transform_indices = @transform_8, window_bounds = array<i64: 1, 128>}, {pipeline_mode = #tpu.pipeline_mode<synchronous>, transform_indices = @transform_9, window_bounds = array<i64: 128, 128>}, {pipeline_mode = #tpu.pipeline_mode<synchronous>, transform_indices = @transform_10, window_bounds = array<i64: 1, 128>}, {pipeline_mode = #tpu.pipeline_mode<synchronous>, transform_indices = @transform_11, window_bounds = array<i64: 128, 128>}, {pipeline_mode = #tpu.pipeline_mode<synchronous>, transform_indices = @transform_12, window_bounds = array<i64: 1, 128>}, {transform_indices = @transform_13, window_bounds = array<i64: 8, 256>}]} {
    %c0 = arith.constant 0 : index
    %c0_0 = arith.constant 0 : index
    %0 = vector.load %arg1[%c0, %c0_0] : memref<8x128xf32, #tpu.memory_space<vmem>>, vector<8x128xf32>
    %c0_1 = arith.constant 0 : index
    %c0_2 = arith.constant 0 : index
    %1 = vector.load %arg2[%c0_1, %c0_2] : memref<128x128xf32, #tpu.memory_space<vmem>>, vector<128x128xf32>
    %cst = arith.constant dense<0.000000e+00> : vector<8x128xf32>
    %2 = tpu.matmul %0, %1, %cst {dimension_numbers = #tpu.dot_dimension_numbers<[1], [0], [0], [1], [0, 0, 1, 1], [], []>} : vector<8x128xf32>, vector<128x128xf32>, vector<8x128xf32> -> vector<8x128xf32>
    %c0_3 = arith.constant 0 : index
    %c0_4 = arith.constant 0 : index
    %3 = vector.load %arg3[%c0_3, %c0_4] : memref<1x128xf32, #tpu.memory_space<vmem>>, vector<1x128xf32>
    %4 = vector.broadcast %3 : vector<1x128xf32> to vector<8x128xf32>
    %5 = arith.addf %2, %4 : vector<8x128xf32>
    %cst_5 = arith.constant 0.000000e+00 : f32
    %6 = vector.broadcast %cst_5 : f32 to vector<8x128xf32>
    %7 = arith.maximumf %5, %6 : vector<8x128xf32>
    %c0_6 = arith.constant 0 : index
    %c0_7 = arith.constant 0 : index
    %8 = vector.load %arg4[%c0_6, %c0_7] : memref<128x128xf32, #tpu.memory_space<vmem>>, vector<128x128xf32>
    %cst_8 = arith.constant dense<0.000000e+00> : vector<8x128xf32>
    %9 = tpu.matmul %7, %8, %cst_8 {dimension_numbers = #tpu.dot_dimension_numbers<[1], [0], [0], [1], [0, 0, 1, 1], [], []>} : vector<8x128xf32>, vector<128x128xf32>, vector<8x128xf32> -> vector<8x128xf32>
    %c0_9 = arith.constant 0 : index
    %c0_10 = arith.constant 0 : index
    %10 = vector.load %arg5[%c0_9, %c0_10] : memref<1x128xf32, #tpu.memory_space<vmem>>, vector<1x128xf32>
    %11 = vector.broadcast %10 : vector<1x128xf32> to vector<8x128xf32>
    %12 = arith.addf %9, %11 : vector<8x128xf32>
    %cst_11 = arith.constant 0.000000e+00 : f32
    %13 = vector.broadcast %cst_11 : f32 to vector<8x128xf32>
    %14 = arith.maximumf %12, %13 : vector<8x128xf32>
    %c0_12 = arith.constant 0 : index
    %c0_13 = arith.constant 0 : index
    %15 = vector.load %arg6[%c0_12, %c0_13] : memref<128x128xf32, #tpu.memory_space<vmem>>, vector<128x128xf32>
    %cst_14 = arith.constant dense<0.000000e+00> : vector<8x128xf32>
    %16 = tpu.matmul %14, %15, %cst_14 {dimension_numbers = #tpu.dot_dimension_numbers<[1], [0], [0], [1], [0, 0, 1, 1], [], []>} : vector<8x128xf32>, vector<128x128xf32>, vector<8x128xf32> -> vector<8x128xf32>
    %c0_15 = arith.constant 0 : index
    %c0_16 = arith.constant 0 : index
    %17 = vector.load %arg7[%c0_15, %c0_16] : memref<1x128xf32, #tpu.memory_space<vmem>>, vector<1x128xf32>
    %18 = vector.broadcast %17 : vector<1x128xf32> to vector<8x128xf32>
    %19 = arith.addf %16, %18 : vector<8x128xf32>
    %c0_17 = arith.constant 0 : index
    %c0_18 = arith.constant 0 : index
    %20 = vector.load %arg8[%c0_17, %c0_18] : memref<128x128xf32, #tpu.memory_space<vmem>>, vector<128x128xf32>
    %cst_19 = arith.constant dense<0.000000e+00> : vector<8x128xf32>
    %21 = tpu.matmul %19, %20, %cst_19 {dimension_numbers = #tpu.dot_dimension_numbers<[1], [0], [0], [1], [0, 0, 1, 1], [], []>} : vector<8x128xf32>, vector<128x128xf32>, vector<8x128xf32> -> vector<8x128xf32>
    %c0_20 = arith.constant 0 : index
    %c0_21 = arith.constant 0 : index
    %22 = vector.load %arg9[%c0_20, %c0_21] : memref<1x128xf32, #tpu.memory_space<vmem>>, vector<1x128xf32>
    %23 = vector.broadcast %22 : vector<1x128xf32> to vector<8x128xf32>
    %24 = arith.addf %21, %23 : vector<8x128xf32>
    %cst_22 = arith.constant 0.000000e+00 : f32
    %25 = vector.broadcast %cst_22 : f32 to vector<8x128xf32>
    %26 = arith.maximumf %24, %25 : vector<8x128xf32>
    %c0_23 = arith.constant 0 : index
    %c0_24 = arith.constant 0 : index
    %27 = vector.load %arg10[%c0_23, %c0_24] : memref<128x128xf32, #tpu.memory_space<vmem>>, vector<128x128xf32>
    %cst_25 = arith.constant dense<0.000000e+00> : vector<8x128xf32>
    %28 = tpu.matmul %26, %27, %cst_25 {dimension_numbers = #tpu.dot_dimension_numbers<[1], [0], [0], [1], [0, 0, 1, 1], [], []>} : vector<8x128xf32>, vector<128x128xf32>, vector<8x128xf32> -> vector<8x128xf32>
    %c0_26 = arith.constant 0 : index
    %c0_27 = arith.constant 0 : index
    %29 = vector.load %arg11[%c0_26, %c0_27] : memref<1x128xf32, #tpu.memory_space<vmem>>, vector<1x128xf32>
    %30 = vector.broadcast %29 : vector<1x128xf32> to vector<8x128xf32>
    %31 = arith.addf %28, %30 : vector<8x128xf32>
    %cst_28 = arith.constant 0.000000e+00 : f32
    %32 = vector.broadcast %cst_28 : f32 to vector<8x128xf32>
    %33 = arith.maximumf %31, %32 : vector<8x128xf32>
    %c0_29 = arith.constant 0 : index
    %c0_30 = arith.constant 0 : index
    %34 = vector.load %arg12[%c0_29, %c0_30] : memref<128x128xf32, #tpu.memory_space<vmem>>, vector<128x128xf32>
    %cst_31 = arith.constant dense<0.000000e+00> : vector<8x128xf32>
    %35 = tpu.matmul %33, %34, %cst_31 {dimension_numbers = #tpu.dot_dimension_numbers<[1], [0], [0], [1], [0, 0, 1, 1], [], []>} : vector<8x128xf32>, vector<128x128xf32>, vector<8x128xf32> -> vector<8x128xf32>
    %c0_32 = arith.constant 0 : index
    %c0_33 = arith.constant 0 : index
    %36 = vector.load %arg13[%c0_32, %c0_33] : memref<1x128xf32, #tpu.memory_space<vmem>>, vector<1x128xf32>
    %37 = vector.broadcast %36 : vector<1x128xf32> to vector<8x128xf32>
    %38 = arith.addf %35, %37 : vector<8x128xf32>
    %c0_34 = arith.constant 0 : index
    %c0_35 = arith.constant 0 : index
    %39 = vector.load %arg14[%c0_34, %c0_35] : memref<8x256xf32, #tpu.memory_space<vmem>>, vector<8x128xf32>
    tpu.vector_store %arg14[%c0_34, %c0_35], %38 {strides = array<i32>} : memref<8x256xf32, #tpu.memory_space<vmem>>, vector<8x128xf32>,
    %c0_36 = arith.constant 0 : index
    %c128 = arith.constant 128 : index
    %40 = vector.load %arg14[%c0_36, %c128] : memref<8x256xf32, #tpu.memory_space<vmem>>, vector<8x128xf32>
    tpu.vector_store %arg14[%c0_36, %c128], %19 {strides = array<i32>} : memref<8x256xf32, #tpu.memory_space<vmem>>, vector<8x128xf32>,
    return
  }
  func.func @transform_0(%arg0: i32) -> (i32, i32) {
    %c0_i32 = arith.constant 0 : i32
    %c0_i32_0 = arith.constant 0 : i32
    return %arg0, %c0_i32 : i32, i32
  }
  func.func @transform_1(%arg0: i32) -> (i32, i32) {
    %c0_i32 = arith.constant 0 : i32
    %c0_i32_0 = arith.constant 0 : i32
    %c0_i32_1 = arith.constant 0 : i32
    return %c0_i32, %c0_i32_0 : i32, i32
  }
  func.func @transform_2(%arg0: i32) -> (i32, i32) {
    %c0_i32 = arith.constant 0 : i32
    %c0_i32_0 = arith.constant 0 : i32
    %c0_i32_1 = arith.constant 0 : i32
    return %c0_i32, %c0_i32_0 : i32, i32
  }
  func.func @transform_3(%arg0: i32) -> (i32, i32) {
    %c0_i32 = arith.constant 0 : i32
    %c0_i32_0 = arith.constant 0 : i32
    %c0_i32_1 = arith.constant 0 : i32
    return %c0_i32, %c0_i32_0 : i32, i32
  }
  func.func @transform_4(%arg0: i32) -> (i32, i32) {
    %c0_i32 = arith.constant 0 : i32
    %c0_i32_0 = arith.constant 0 : i32
    %c0_i32_1 = arith.constant 0 : i32
    return %c0_i32, %c0_i32_0 : i32, i32
  }
  func.func @transform_5(%arg0: i32) -> (i32, i32) {
    %c0_i32 = arith.constant 0 : i32
    %c0_i32_0 = arith.constant 0 : i32
    %c0_i32_1 = arith.constant 0 : i32
    return %c0_i32, %c0_i32_0 : i32, i32
  }
  func.func @transform_6(%arg0: i32) -> (i32, i32) {
    %c0_i32 = arith.constant 0 : i32
    %c0_i32_0 = arith.constant 0 : i32
    %c0_i32_1 = arith.constant 0 : i32
    return %c0_i32, %c0_i32_0 : i32, i32
  }
  func.func @transform_7(%arg0: i32) -> (i32, i32) {
    %c0_i32 = arith.constant 0 : i32
    %c0_i32_0 = arith.constant 0 : i32
    %c0_i32_1 = arith.constant 0 : i32
    return %c0_i32, %c0_i32_0 : i32, i32
  }
  func.func @transform_8(%arg0: i32) -> (i32, i32) {
    %c0_i32 = arith.constant 0 : i32
    %c0_i32_0 = arith.constant 0 : i32
    %c0_i32_1 = arith.constant 0 : i32
    return %c0_i32, %c0_i32_0 : i32, i32
  }
  func.func @transform_9(%arg0: i32) -> (i32, i32) {
    %c0_i32 = arith.constant 0 : i32
    %c0_i32_0 = arith.constant 0 : i32
    %c0_i32_1 = arith.constant 0 : i32
    return %c0_i32, %c0_i32_0 : i32, i32
  }
  func.func @transform_10(%arg0: i32) -> (i32, i32) {
    %c0_i32 = arith.constant 0 : i32
    %c0_i32_0 = arith.constant 0 : i32
    %c0_i32_1 = arith.constant 0 : i32
    return %c0_i32, %c0_i32_0 : i32, i32
  }
  func.func @transform_11(%arg0: i32) -> (i32, i32) {
    %c0_i32 = arith.constant 0 : i32
    %c0_i32_0 = arith.constant 0 : i32
    %c0_i32_1 = arith.constant 0 : i32
    return %c0_i32, %c0_i32_0 : i32, i32
  }
  func.func @transform_12(%arg0: i32) -> (i32, i32) {
    %c0_i32 = arith.constant 0 : i32
    %c0_i32_0 = arith.constant 0 : i32
    %c0_i32_1 = arith.constant 0 : i32
    return %c0_i32, %c0_i32_0 : i32, i32
  }
  func.func @transform_13(%arg0: i32) -> (i32, i32) {
    %c0_i32 = arith.constant 0 : i32
    %c0_i32_0 = arith.constant 0 : i32
    return %arg0, %c0_i32 : i32, i32
  }
}

</mosaic_0001>

<llo_original>
// kernel: tpu_custom_call.1
$region0: #{tpu_custom_call.1}
  #allocation0 [shape = 'u32[]', space=smem, size = 0x4, offset = 0x4, fixed_abs, tag = 'smem constant byte address 0x4 - core index']
  #allocation1 [shape = 'u32[144,128]{1,0:T(1,128)}', space=vmem, size = 0x12000, scoped, tag = 'internal scratch']
  %s0 = inlined_call_operand.hbm [shape: f32[16,128], index: 0, kind: input, shape index: {}]
  %s1 = inlined_call_operand.hbm [shape: f32[128,128], index: 1, kind: input, shape index: {}]
  %s2 = inlined_call_operand.vmem [shape: f32[1,128], index: 2, kind: input, shape index: {}]
  %s3 = inlined_call_operand.hbm [shape: f32[128,128], index: 3, kind: input, shape index: {}]
  %s4 = inlined_call_operand.vmem [shape: f32[1,128], index: 4, kind: input, shape index: {}]
  %s5 = inlined_call_operand.hbm [shape: f32[128,128], index: 5, kind: input, shape index: {}]
  %s6 = inlined_call_operand.vmem [shape: f32[1,128], index: 6, kind: input, shape index: {}]
  %s7 = inlined_call_operand.hbm [shape: f32[128,128], index: 7, kind: input, shape index: {}]
  %s8 = inlined_call_operand.vmem [shape: f32[1,128], index: 8, kind: input, shape index: {}]
  %s9 = inlined_call_operand.hbm [shape: f32[128,128], index: 9, kind: input, shape index: {}]
  %s10 = inlined_call_operand.vmem [shape: f32[1,128], index: 10, kind: input, shape index: {}]
  %s11 = inlined_call_operand.hbm [shape: f32[128,128], index: 11, kind: input, shape index: {}]
  %s12 = inlined_call_operand.vmem [shape: f32[1,128], index: 12, kind: input, shape index: {}]
  %s13 = inlined_call_operand.hbm [shape: f32[16,256], index: 13, kind: output, shape index: {}]
  %s14 = sld [smem:[#allocation0]]
  $region113: #{tpu_custom_call.1} parent=0
    _
  %s16 = ssub.s32 1, %s14
  %s17 = scalar_select 0, %s16, %s14
  $region1: #{tpu_custom_call.1} parent=0
    #allocation2 [shape = 'u8[8192]{0}', space=vmem, size = 0x2000, scoped, tag = 'input window, operand 0']
    #allocation3 [shape = 's32[2]{0}', space=sflag, size = 0x8, scoped, tag = 'scoped memory for tpu_custom_call.1']
    #allocation4 [shape = 's32[2]{0}', space=sflag, size = 0x8, scoped, tag = 'scoped memory for tpu_custom_call.1']
    #allocation5 [shape = 'u8[65536]{0}', space=vmem, size = 0x10000, scoped, tag = 'input window, operand 1, single buffered']
    #allocation6 [shape = 's32[1]{0}', space=sflag, size = 0x4, scoped, tag = 'scoped memory for tpu_custom_call.1']
    #allocation7 [shape = 'u8[65536]{0}', space=vmem, size = 0x10000, scoped, tag = 'input window, operand 3, single buffered']
    #allocation8 [shape = 'u8[65536]{0}', space=vmem, size = 0x10000, scoped, tag = 'input window, operand 5, single buffered']
    #allocation9 [shape = 's32[1]{0}', space=sflag, size = 0x4, scoped, tag = 'scoped memory for tpu_custom_call.1']
    #allocation10 [shape = 'u8[65536]{0}', space=vmem, size = 0x10000, scoped, tag = 'input window, operand 7, single buffered']
    #allocation11 [shape = 'u8[65536]{0}', space=vmem, size = 0x10000, scoped, tag = 'input window, operand 9, single buffered']
    #allocation12 [shape = 's32[1]{0}', space=sflag, size = 0x4, scoped, tag = 'scoped memory for tpu_custom_call.1']
    #allocation13 [shape = 'u8[65536]{0}', space=vmem, size = 0x10000, scoped, tag = 'input window, operand 11, single buffered']
    #allocation14 [shape = 'u8[16384]{0}', space=vmem, size = 0x4000, scoped, tag = 'output window, operand 0']
    %18 = vsyncpa [#allocation3], 0
    %s19 = scalar_lea.sflag [#allocation3], 1
    %20 = vsyncpa %s19, 0
    %21 = vsyncpa [#allocation6], 0
    %22 = vsyncpa [#allocation9], 0
    %23 = vsyncpa [#allocation12], 0
    %24 = vsyncpa [#allocation4], 0
    %s25 = scalar_lea.sflag [#allocation4], 1
    %26 = vsyncpa %s25, 0
    loop: start=0, step=1, limit=4
    $region2: #{tpu_custom_call.1} parent=1 // loop_pre_header
      _
    $region3: #{tpu_custom_call.1} parent=1 // loop_header
      %s28 = sphi 0, %s32
      %p29 = scmp.ge.s32.totalorder %s28, 4
      %s38 = sphi 0, %s40
      %s41 = sphi 0, %s38
      %s42 = sphi 0, %s41
      %s58 = sphi 0, %s42
      %s62 = sphi 0, %s62
      %s64 = sphi 0, %s62
      %s65 = sphi 0, %s64
      %s79 = sphi 0, %s65
      %s83 = sphi 0, %s83
      %s85 = sphi 0, %s83
      %s86 = sphi 0, %s85
      %s100 = sphi 0, %s86
      %s104 = sphi 0, %s104
      %s106 = sphi 0, %s104
      %s107 = sphi 0, %s106
      %s121 = sphi 0, %s107
      %s125 = sphi 0, %s125
      %s127 = sphi 0, %s125
      %s128 = sphi 0, %s127
      %s142 = sphi 0, %s128
      %s146 = sphi 0, %s146
      %s148 = sphi 0, %s146
      %s149 = sphi 0, %s148
      %s163 = sphi 0, %s149
      %s167 = sphi 0, %s167
      %s169 = sphi 0, %s167
      %s170 = sphi 0, %s169
      %s184 = sphi 0, %s170
      %s188 = sphi 0, %s188
      %s190 = sphi 0, %s188
      %s191 = sphi 0, %s190
      %s205 = sphi 0, %s191
      %s209 = sphi 0, %s209
      %s211 = sphi 0, %s209
      %s212 = sphi 0, %s211
      %s226 = sphi 0, %s212
      %s230 = sphi 0, %s230
      %s232 = sphi 0, %s230
      %s233 = sphi 0, %s232
      %s247 = sphi 0, %s233
      %s251 = sphi 0, %s251
      %s253 = sphi 0, %s251
      %s254 = sphi 0, %s253
      %s268 = sphi 0, %s254
      %s272 = sphi 0, %s272
      %s274 = sphi 0, %s272
      %s275 = sphi 0, %s274
      %s289 = sphi 0, %s275
      %s293 = sphi 0, %s293
      %s295 = sphi 0, %s293
      %s296 = sphi 0, %s295
      %s310 = sphi 0, %s296
      %s316 = sphi 0, %s318
      %s319 = sphi 0, %s316
      %s320 = sphi 0, %s319
      %s336 = sphi 0, %s320
    $region4: #{tpu_custom_call.1} parent=1 // loop_header_branch
      %31 = sbr.rel (%p29) target = $region8
    $region5: #{tpu_custom_call.1} parent=1 // loop_body
      %s33 = ssub.s32 %s28, 1
      %s34 = ssub.s32 %s28, 2
      %s35 = sadd.s32 %s28, 1
      %s36 = ssub.s32 %s28, %s35
      %p37 = scmp.eq.s32.totalorder %s36, 0
      %s39 = sadd.s32 %s38, 1
      %s40 = scalar_select %p37, %s38, %s39
      %p43 = pneg %p37
      %p44 = scmp.eq.s32.totalorder %s28, 1
      %p45 = por %p43, %p44
      %p46 = scmp.ne.s32.totalorder %s38, %s41
      %p47 = scmp.eq.s32.totalorder %s28, 0
      %p48 = por %p46, %p47
      %p49 = scmp.ne.s32.totalorder %s38, %s41
      %p50 = scmp.eq.s32.totalorder %s33, 1
      %p51 = por %p49, %p50
      %p52 = scmp.ne.s32.totalorder %s41, %s42
      %p53 = scmp.eq.s32.totalorder %s33, 0
      %p54 = por %p52, %p53
      %p55 = scmp.ne.s32.totalorder %s41, %s42
      %p56 = scmp.eq.s32.totalorder %s34, 1
      %p57 = por %p55, %p56
      %p59 = scmp.ne.s32.totalorder %s42, %s58
      %p60 = scmp.eq.s32.totalorder %s34, 0
      %p61 = por %p59, %p60
      %s63 = sadd.s32 %s62, 1
      %p66 = scmp.eq.s32.totalorder %s28, 1
      %p67 = scmp.ne.s32.totalorder %s62, %s64
      %p68 = scmp.eq.s32.totalorder %s28, 0
      %p69 = por %p67, %p68
      %p70 = scmp.ne.s32.totalorder %s62, %s64
      %p71 = scmp.eq.s32.totalorder %s33, 1
      %p72 = por %p70, %p71
      %p73 = scmp.ne.s32.totalorder %s64, %s65
      %p74 = scmp.eq.s32.totalorder %s33, 0
      %p75 = por %p73, %p74
      %p76 = scmp.ne.s32.totalorder %s64, %s65
      %p77 = scmp.eq.s32.totalorder %s34, 1
      %p78 = por %p76, %p77
      %p80 = scmp.ne.s32.totalorder %s65, %s79
      %p81 = scmp.eq.s32.totalorder %s34, 0
      %p82 = por %p80, %p81
      %s84 = sadd.s32 %s83, 1
      %p87 = scmp.eq.s32.totalorder %s28, 1
      %p88 = scmp.ne.s32.totalorder %s83, %s85
      %p89 = scmp.eq.s32.totalorder %s28, 0
      %p90 = por %p88, %p89
      %p91 = scmp.ne.s32.totalorder %s83, %s85
      %p92 = scmp.eq.s32.totalorder %s33, 1
      %p93 = por %p91, %p92
      %p94 = scmp.ne.s32.totalorder %s85, %s86
      %p95 = scmp.eq.s32.totalorder %s33, 0
      %p96 = por %p94, %p95
      %p97 = scmp.ne.s32.totalorder %s85, %s86
      %p98 = scmp.eq.s32.totalorder %s34, 1
      %p99 = por %p97, %p98
      %p101 = scmp.ne.s32.totalorder %s86, %s100
      %p102 = scmp.eq.s32.totalorder %s34, 0
      %p103 = por %p101, %p102
      %s105 = sadd.s32 %s104, 1
      %p108 = scmp.eq.s32.totalorder %s28, 1
      %p109 = scmp.ne.s32.totalorder %s104, %s106
      %p110 = scmp.eq.s32.totalorder %s28, 0
      %p111 = por %p109, %p110
      %p112 = scmp.ne.s32.totalorder %s104, %s106
      %p113 = scmp.eq.s32.totalorder %s33, 1
      %p114 = por %p112, %p113
      %p115 = scmp.ne.s32.totalorder %s106, %s107
      %p116 = scmp.eq.s32.totalorder %s33, 0
      %p117 = por %p115, %p116
      %p118 = scmp.ne.s32.totalorder %s106, %s107
      %p119 = scmp.eq.s32.totalorder %s34, 1
      %p120 = por %p118, %p119
      %p122 = scmp.ne.s32.totalorder %s107, %s121
      %p123 = scmp.eq.s32.totalorder %s34, 0
      %p124 = por %p122, %p123
      %s126 = sadd.s32 %s125, 1
      %p129 = scmp.eq.s32.totalorder %s28, 1
      %p130 = scmp.ne.s32.totalorder %s125, %s127
      %p131 = scmp.eq.s32.totalorder %s28, 0
      %p132 = por %p130, %p131
      %p133 = scmp.ne.s32.totalorder %s125, %s127
      %p134 = scmp.eq.s32.totalorder %s33, 1
      %p135 = por %p133, %p134
      %p136 = scmp.ne.s32.totalorder %s127, %s128
      %p137 = scmp.eq.s32.totalorder %s33, 0
      %p138 = por %p136, %p137
      %p139 = scmp.ne.s32.totalorder %s127, %s128
      %p140 = scmp.eq.s32.totalorder %s34, 1
      %p141 = por %p139, %p140
      %p143 = scmp.ne.s32.totalorder %s128, %s142
      %p144 = scmp.eq.s32.totalorder %s34, 0
      %p145 = por %p143, %p144
      %s147 = sadd.s32 %s146, 1
      %p150 = scmp.eq.s32.totalorder %s28, 1
      %p151 = scmp.ne.s32.totalorder %s146, %s148
      %p152 = scmp.eq.s32.totalorder %s28, 0
      %p153 = por %p151, %p152
      %p154 = scmp.ne.s32.totalorder %s146, %s148
      %p155 = scmp.eq.s32.totalorder %s33, 1
      %p156 = por %p154, %p155
      %p157 = scmp.ne.s32.totalorder %s148, %s149
      %p158 = scmp.eq.s32.totalorder %s33, 0
      %p159 = por %p157, %p158
      %p160 = scmp.ne.s32.totalorder %s148, %s149
      %p161 = scmp.eq.s32.totalorder %s34, 1
      %p162 = por %p160, %p161
      %p164 = scmp.ne.s32.totalorder %s149, %s163
      %p165 = scmp.eq.s32.totalorder %s34, 0
      %p166 = por %p164, %p165
      %s168 = sadd.s32 %s167, 1
      %p171 = scmp.eq.s32.totalorder %s28, 1
      %p172 = scmp.ne.s32.totalorder %s167, %s169
      %p173 = scmp.eq.s32.totalorder %s28, 0
      %p174 = por %p172, %p173
      %p175 = scmp.ne.s32.totalorder %s167, %s169
      %p176 = scmp.eq.s32.totalorder %s33, 1
      %p177 = por %p175, %p176
      %p178 = scmp.ne.s32.totalorder %s169, %s170
      %p179 = scmp.eq.s32.totalorder %s33, 0
      %p180 = por %p178, %p179
      %p181 = scmp.ne.s32.totalorder %s169, %s170
      %p182 = scmp.eq.s32.totalorder %s34, 1
      %p183 = por %p181, %p182
      %p185 = scmp.ne.s32.totalorder %s170, %s184
      %p186 = scmp.eq.s32.totalorder %s34, 0
      %p187 = por %p185, %p186
      %s189 = sadd.s32 %s188, 1
      %p192 = scmp.eq.s32.totalorder %s28, 1
      %p193 = scmp.ne.s32.totalorder %s188, %s190
      %p194 = scmp.eq.s32.totalorder %s28, 0
      %p195 = por %p193, %p194
      %p196 = scmp.ne.s32.totalorder %s188, %s190
      %p197 = scmp.eq.s32.totalorder %s33, 1
      %p198 = por %p196, %p197
      %p199 = scmp.ne.s32.totalorder %s190, %s191
      %p200 = scmp.eq.s32.totalorder %s33, 0
      %p201 = por %p199, %p200
      %p202 = scmp.ne.s32.totalorder %s190, %s191
      %p203 = scmp.eq.s32.totalorder %s34, 1
      %p204 = por %p202, %p203
      %p206 = scmp.ne.s32.totalorder %s191, %s205
      %p207 = scmp.eq.s32.totalorder %s34, 0
      %p208 = por %p206, %p207
      %s210 = sadd.s32 %s209, 1
      %p213 = scmp.eq.s32.totalorder %s28, 1
      %p214 = scmp.ne.s32.totalorder %s209, %s211
      %p215 = scmp.eq.s32.totalorder %s28, 0
      %p216 = por %p214, %p215
      %p217 = scmp.ne.s32.totalorder %s209, %s211
      %p218 = scmp.eq.s32.totalorder %s33, 1
      %p219 = por %p217, %p218
      %p220 = scmp.ne.s32.totalorder %s211, %s212
      %p221 = scmp.eq.s32.totalorder %s33, 0
      %p222 = por %p220, %p221
      %p223 = scmp.ne.s32.totalorder %s211, %s212
      %p224 = scmp.eq.s32.totalorder %s34, 1
      %p225 = por %p223, %p224
      %p227 = scmp.ne.s32.totalorder %s212, %s226
      %p228 = scmp.eq.s32.totalorder %s34, 0
      %p229 = por %p227, %p228
      %s231 = sadd.s32 %s230, 1
      %p234 = scmp.eq.s32.totalorder %s28, 1
      %p235 = scmp.ne.s32.totalorder %s230, %s232
      %p236 = scmp.eq.s32.totalorder %s28, 0
      %p237 = por %p235, %p236
      %p238 = scmp.ne.s32.totalorder %s230, %s232
      %p239 = scmp.eq.s32.totalorder %s33, 1
      %p240 = por %p238, %p239
      %p241 = scmp.ne.s32.totalorder %s232, %s233
      %p242 = scmp.eq.s32.totalorder %s33, 0
      %p243 = por %p241, %p242
      %p244 = scmp.ne.s32.totalorder %s232, %s233
      %p245 = scmp.eq.s32.totalorder %s34, 1
      %p246 = por %p244, %p245
      %p248 = scmp.ne.s32.totalorder %s233, %s247
      %p249 = scmp.eq.s32.totalorder %s34, 0
      %p250 = por %p248, %p249
      %s252 = sadd.s32 %s251, 1
      %p255 = scmp.eq.s32.totalorder %s28, 1
      %p256 = scmp.ne.s32.totalorder %s251, %s253
      %p257 = scmp.eq.s32.totalorder %s28, 0
      %p258 = por %p256, %p257
      %p259 = scmp.ne.s32.totalorder %s251, %s253
      %p260 = scmp.eq.s32.totalorder %s33, 1
      %p261 = por %p259, %p260
      %p262 = scmp.ne.s32.totalorder %s253, %s254
      %p263 = scmp.eq.s32.totalorder %s33, 0
      %p264 = por %p262, %p263
      %p265 = scmp.ne.s32.totalorder %s253, %s254
      %p266 = scmp.eq.s32.totalorder %s34, 1
      %p267 = por %p265, %p266
      %p269 = scmp.ne.s32.totalorder %s254, %s268
      %p270 = scmp.eq.s32.totalorder %s34, 0
      %p271 = por %p269, %p270
      %s273 = sadd.s32 %s272, 1
      %p276 = scmp.eq.s32.totalorder %s28, 1
      %p277 = scmp.ne.s32.totalorder %s272, %s274
      %p278 = scmp.eq.s32.totalorder %s28, 0
      %p279 = por %p277, %p278
      %p280 = scmp.ne.s32.totalorder %s272, %s274
      %p281 = scmp.eq.s32.totalorder %s33, 1
      %p282 = por %p280, %p281
      %p283 = scmp.ne.s32.totalorder %s274, %s275
      %p284 = scmp.eq.s32.totalorder %s33, 0
      %p285 = por %p283, %p284
      %p286 = scmp.ne.s32.totalorder %s274, %s275
      %p287 = scmp.eq.s32.totalorder %s34, 1
      %p288 = por %p286, %p287
      %p290 = scmp.ne.s32.totalorder %s275, %s289
      %p291 = scmp.eq.s32.totalorder %s34, 0
      %p292 = por %p290, %p291
      %s294 = sadd.s32 %s293, 1
      %p297 = scmp.eq.s32.totalorder %s28, 1
      %p298 = scmp.ne.s32.totalorder %s293, %s295
      %p299 = scmp.eq.s32.totalorder %s28, 0
      %p300 = por %p298, %p299
      %p301 = scmp.ne.s32.totalorder %s293, %s295
      %p302 = scmp.eq.s32.totalorder %s33, 1
      %p303 = por %p301, %p302
      %p304 = scmp.ne.s32.totalorder %s295, %s296
      %p305 = scmp.eq.s32.totalorder %s33, 0
      %p306 = por %p304, %p305
      %p307 = scmp.ne.s32.totalorder %s295, %s296
      %p308 = scmp.eq.s32.totalorder %s34, 1
      %p309 = por %p307, %p308
      %p311 = scmp.ne.s32.totalorder %s296, %s310
      %p312 = scmp.eq.s32.totalorder %s34, 0
      %p313 = por %p311, %p312
      %s314 = ssub.s32 %s28, %s35
      %p315 = scmp.eq.s32.totalorder %s314, 0
      %s317 = sadd.s32 %s316, 1
      %s318 = scalar_select %p315, %s316, %s317
      %p321 = pneg %p315
      %p322 = scmp.eq.s32.totalorder %s28, 1
      %p323 = por %p321, %p322
      %p324 = scmp.ne.s32.totalorder %s316, %s319
      %p325 = scmp.eq.s32.totalorder %s28, 0
      %p326 = por %p324, %p325
      %p327 = scmp.ne.s32.totalorder %s316, %s319
      %p328 = scmp.eq.s32.totalorder %s33, 1
      %p329 = por %p327, %p328
      %p330 = scmp.ne.s32.totalorder %s319, %s320
      %p331 = scmp.eq.s32.totalorder %s33, 0
      %p332 = por %p330, %p331
      %p333 = scmp.ne.s32.totalorder %s319, %s320
      %p334 = scmp.eq.s32.totalorder %s34, 1
      %p335 = por %p333, %p334
      %p337 = scmp.ne.s32.totalorder %s320, %s336
      %p338 = scmp.eq.s32.totalorder %s34, 0
      %p339 = por %p337, %p338
      %p340 = scmp.le.s32.totalorder 1, %s28
      %p341 = scmp.lt.s32.totalorder %s28, 3
      %p342 = pnand %p340, %p341
      %p343 = pneg %p342
      // Predicated region
      $region9: #{tpu_custom_call.1} parent=5 // pred_check
        _
      $region10: #{tpu_custom_call.1} parent=5 // pred_check_branch
        %345 = sbr.rel (%p342) target = $region12
      $region11: #{tpu_custom_call.1} parent=5 // pred_region
        %s346 = ssub.s32 %s28, 1
        // Predicated region
        $region13: #{tpu_custom_call.1} parent=11 // pred_check
          %p347 = pneg %p75
        $region14: #{tpu_custom_call.1} parent=11 // pred_check_branch
          %349 = sbr.rel (%p347) target = $region16
        $region15: #{tpu_custom_call.1} parent=11 // pred_region
          %s351 = ssub.s32 2048, 2048
          %352 = vsyncadd [#allocation6], %s351
          %s353 = sshll.u32 [#allocation5], 4
          %s354 = int_to_ptr.vmem [resolvable:$true] %s353
          %359 = dma.hbm_to_vmem [thread:$0]  %s1, 2048, %s354, [#allocation6], 128, 128, 8
        $region16: #{tpu_custom_call.1} parent=11 // pred_fallthru
          _
        // Predicated region
        $region17: #{tpu_custom_call.1} parent=11 // pred_check
          %p360 = pneg %p96
        $region18: #{tpu_custom_call.1} parent=11 // pred_check_branch
          %362 = sbr.rel (%p360) target = $region20
        $region19: #{tpu_custom_call.1} parent=11 // pred_region
          _
        $region20: #{tpu_custom_call.1} parent=11 // pred_fallthru
          _
        // Predicated region
        $region21: #{tpu_custom_call.1} parent=11 // pred_check
          %p363 = pneg %p117
        $region22: #{tpu_custom_call.1} parent=11 // pred_check_branch
          %365 = sbr.rel (%p363) target = $region24
        $region23: #{tpu_custom_call.1} parent=11 // pred_region
          %s367 = ssub.s32 2048, 2048
          %368 = vsyncadd [#allocation6], %s367
          %s369 = sshll.u32 [#allocation7], 4
          %s370 = int_to_ptr.vmem [resolvable:$true] %s369
          %375 = dma.hbm_to_vmem [thread:$0]  %s3, 2048, %s370, [#allocation6], 128, 128, 8
        $region24: #{tpu_custom_call.1} parent=11 // pred_fallthru
          _
        // Predicated region
        $region25: #{tpu_custom_call.1} parent=11 // pred_check
          %p376 = pneg %p138
        $region26: #{tpu_custom_call.1} parent=11 // pred_check_branch
          %378 = sbr.rel (%p376) target = $region28
        $region27: #{tpu_custom_call.1} parent=11 // pred_region
          _
        $region28: #{tpu_custom_call.1} parent=11 // pred_fallthru
          _
        // Predicated region
        $region29: #{tpu_custom_call.1} parent=11 // pred_check
          %p379 = pneg %p159
        $region30: #{tpu_custom_call.1} parent=11 // pred_check_branch
          %381 = sbr.rel (%p379) target = $region32
        $region31: #{tpu_custom_call.1} parent=11 // pred_region
          %s383 = ssub.s32 2048, 2048
          %384 = vsyncadd [#allocation9], %s383
          %s385 = sshll.u32 [#allocation8], 4
          %s386 = int_to_ptr.vmem [resolvable:$true] %s385
          %391 = dma.hbm_to_vmem [thread:$0]  %s5, 2048, %s386, [#allocation9], 128, 128, 8
        $region32: #{tpu_custom_call.1} parent=11 // pred_fallthru
          _
        // Predicated region
        $region33: #{tpu_custom_call.1} parent=11 // pred_check
          %p392 = pneg %p180
        $region34: #{tpu_custom_call.1} parent=11 // pred_check_branch
          %394 = sbr.rel (%p392) target = $region36
        $region35: #{tpu_custom_call.1} parent=11 // pred_region
          _
        $region36: #{tpu_custom_call.1} parent=11 // pred_fallthru
          _
        // Predicated region
        $region37: #{tpu_custom_call.1} parent=11 // pred_check
          %p395 = pneg %p201
        $region38: #{tpu_custom_call.1} parent=11 // pred_check_branch
          %397 = sbr.rel (%p395) target = $region40
        $region39: #{tpu_custom_call.1} parent=11 // pred_region
          %s399 = ssub.s32 2048, 2048
          %400 = vsyncadd [#allocation9], %s399
          %s401 = sshll.u32 [#allocation10], 4
          %s402 = int_to_ptr.vmem [resolvable:$true] %s401
          %407 = dma.hbm_to_vmem [thread:$0]  %s7, 2048, %s402, [#allocation9], 128, 128, 8
        $region40: #{tpu_custom_call.1} parent=11 // pred_fallthru
          _
        // Predicated region
        $region41: #{tpu_custom_call.1} parent=11 // pred_check
          %p408 = pneg %p222
        $region42: #{tpu_custom_call.1} parent=11 // pred_check_branch
          %410 = sbr.rel (%p408) target = $region44
        $region43: #{tpu_custom_call.1} parent=11 // pred_region
          _
        $region44: #{tpu_custom_call.1} parent=11 // pred_fallthru
          _
        // Predicated region
        $region45: #{tpu_custom_call.1} parent=11 // pred_check
          %p411 = pneg %p243
        $region46: #{tpu_custom_call.1} parent=11 // pred_check_branch
          %413 = sbr.rel (%p411) target = $region48
        $region47: #{tpu_custom_call.1} parent=11 // pred_region
          %s415 = ssub.s32 2048, 2048
          %416 = vsyncadd [#allocation12], %s415
          %s417 = sshll.u32 [#allocation11], 4
          %s418 = int_to_ptr.vmem [resolvable:$true] %s417
          %423 = dma.hbm_to_vmem [thread:$0]  %s9, 2048, %s418, [#allocation12], 128, 128, 8
        $region48: #{tpu_custom_call.1} parent=11 // pred_fallthru
          _
        // Predicated region
        $region49: #{tpu_custom_call.1} parent=11 // pred_check
          %p424 = pneg %p264
        $region50: #{tpu_custom_call.1} parent=11 // pred_check_branch
          %426 = sbr.rel (%p424) target = $region52
        $region51: #{tpu_custom_call.1} parent=11 // pred_region
          _
        $region52: #{tpu_custom_call.1} parent=11 // pred_fallthru
          _
        // Predicated region
        $region53: #{tpu_custom_call.1} parent=11 // pred_check
          %p427 = pneg %p285
        $region54: #{tpu_custom_call.1} parent=11 // pred_check_branch
          %429 = sbr.rel (%p427) target = $region56
        $region55: #{tpu_custom_call.1} parent=11 // pred_region
          %s431 = ssub.s32 2048, 2048
          %432 = vsyncadd [#allocation12], %s431
          %s433 = sshll.u32 [#allocation13], 4
          %s434 = int_to_ptr.vmem [resolvable:$true] %s433
          %439 = dma.hbm_to_vmem [thread:$0]  %s11, 2048, %s434, [#allocation12], 128, 128, 8
        $region56: #{tpu_custom_call.1} parent=11 // pred_fallthru
          _
        // Predicated region
        $region57: #{tpu_custom_call.1} parent=11 // pred_check
          %p440 = pneg %p306
        $region58: #{tpu_custom_call.1} parent=11 // pred_check_branch
          %442 = sbr.rel (%p440) target = $region60
        $region59: #{tpu_custom_call.1} parent=11 // pred_region
          _
        $region60: #{tpu_custom_call.1} parent=11 // pred_fallthru
          _
      $region12: #{tpu_custom_call.1} parent=5 // pred_fallthru
        _
      %p443 = scmp.lt.s32.totalorder %s28, 2
      // Predicated region
      $region61: #{tpu_custom_call.1} parent=5 // pred_check
        %p444 = pneg %p443
      $region62: #{tpu_custom_call.1} parent=5 // pred_check_branch
        %446 = sbr.rel (%p444) target = $region64
      $region63: #{tpu_custom_call.1} parent=5 // pred_region
        // Predicated region
        $region65: #{tpu_custom_call.1} parent=63 // pred_check
          %p447 = pneg %p48
        $region66: #{tpu_custom_call.1} parent=63 // pred_check_branch
          %449 = sbr.rel (%p447) target = $region68
        $region67: #{tpu_custom_call.1} parent=63 // pred_region
          %s450 = sand.u32 %s38, 1
          %s451 = scalar_lea.sflag [#allocation3], %s450
          %s452 = sand.u32 %s38, 1
          %s453 = smul.addr %s452, 8
          %s454 = scalar_lea.vmem [#allocation2], %s453
          %s456 = ssub.s32 128, 128
          %457 = vsyncadd %s451, %s456
          %s458 = smul.addr %s28, 128
          %s459 = scalar_lea.hbm %s0, %s458
          %s461 = sshll.u32 %s454, 4
          %s462 = int_to_ptr.vmem [resolvable:$true] %s461
          %464 = dma.hbm_to_vmem [thread:$0]  %s459, 128, %s462, %s451
        $region68: #{tpu_custom_call.1} parent=63 // pred_fallthru
          _
      $region64: #{tpu_custom_call.1} parent=5 // pred_fallthru
        _
      %p465 = scmp.le.s32.totalorder 1, %s28
      %p466 = scmp.lt.s32.totalorder %s28, 3
      %p467 = pnand %p465, %p466
      %p468 = pneg %p467
      // Predicated region
      $region69: #{tpu_custom_call.1} parent=5 // pred_check
        _
      $region70: #{tpu_custom_call.1} parent=5 // pred_check_branch
        %470 = sbr.rel (%p467) target = $region72
      $region71: #{tpu_custom_call.1} parent=5 // pred_region
        %s471 = ssub.s32 %s28, 1
        %s472 = sand.u32 %s41, 1
        %s473 = scalar_lea.sflag [#allocation3], %s472
        %s474 = sand.u32 %s41, 1
        %s475 = smul.addr %s474, 8
        %s476 = scalar_lea.vmem [#allocation2], %s475
        // Predicated region
        $region73: #{tpu_custom_call.1} parent=71 // pred_check
          %p477 = pneg %p54
        $region74: #{tpu_custom_call.1} parent=71 // pred_check_branch
          %479 = sbr.rel (%p477) target = $region76
        $region75: #{tpu_custom_call.1} parent=71 // pred_region
          %480 = dma.done %s473, 128
        $region76: #{tpu_custom_call.1} parent=71 // pred_fallthru
          _
        // Predicated region
        $region77: #{tpu_custom_call.1} parent=71 // pred_check
          %p481 = pneg %p75
        $region78: #{tpu_custom_call.1} parent=71 // pred_check_branch
          %483 = sbr.rel (%p481) target = $region80
        $region79: #{tpu_custom_call.1} parent=71 // pred_region
          %484 = dma.done [#allocation6], 2048
        $region80: #{tpu_custom_call.1} parent=71 // pred_fallthru
          _
        // Predicated region
        $region81: #{tpu_custom_call.1} parent=71 // pred_check
          %p485 = pneg %p117
        $region82: #{tpu_custom_call.1} parent=71 // pred_check_branch
          %487 = sbr.rel (%p485) target = $region84
        $region83: #{tpu_custom_call.1} parent=71 // pred_region
          %488 = dma.done [#allocation6], 2048
        $region84: #{tpu_custom_call.1} parent=71 // pred_fallthru
          _
        // Predicated region
        $region85: #{tpu_custom_call.1} parent=71 // pred_check
          %p489 = pneg %p159
        $region86: #{tpu_custom_call.1} parent=71 // pred_check_branch
          %491 = sbr.rel (%p489) target = $region88
        $region87: #{tpu_custom_call.1} parent=71 // pred_region
          %492 = dma.done [#allocation9], 2048
        $region88: #{tpu_custom_call.1} parent=71 // pred_fallthru
          _
        // Predicated region
        $region89: #{tpu_custom_call.1} parent=71 // pred_check
          %p493 = pneg %p201
        $region90: #{tpu_custom_call.1} parent=71 // pred_check_branch
          %495 = sbr.rel (%p493) target = $region92
        $region91: #{tpu_custom_call.1} parent=71 // pred_region
          %496 = dma.done [#allocation9], 2048
        $region92: #{tpu_custom_call.1} parent=71 // pred_fallthru
          _
        // Predicated region
        $region93: #{tpu_custom_call.1} parent=71 // pred_check
          %p497 = pneg %p243
        $region94: #{tpu_custom_call.1} parent=71 // pred_check_branch
          %499 = sbr.rel (%p497) target = $region96
        $region95: #{tpu_custom_call.1} parent=71 // pred_region
          %500 = dma.done [#allocation12], 2048
        $region96: #{tpu_custom_call.1} parent=71 // pred_fallthru
          _
        // Predicated region
        $region97: #{tpu_custom_call.1} parent=71 // pred_check
          %p501 = pneg %p285
        $region98: #{tpu_custom_call.1} parent=71 // pred_check_branch
          %503 = sbr.rel (%p501) target = $region100
        $region99: #{tpu_custom_call.1} parent=71 // pred_region
          %504 = dma.done [#allocation12], 2048
        $region100: #{tpu_custom_call.1} parent=71 // pred_fallthru
          _
        %s505 = sand.u32 %s41, 1
        %s506 = scalar_lea.sflag [#allocation3], %s505
        %s507 = sand.u32 %s41, 1
        %s508 = smul.addr %s507, 8
        %s509 = scalar_lea.vmem [#allocation2], %s508
        %p510 = pneg %p54
        %p511 = pneg %p51
        %p512 = pneg %p75
        %p513 = pneg %p72
        %p514 = pneg %p96
        %p515 = pneg %p93
        %p516 = pneg %p117
        %p517 = pneg %p114
        %p518 = pneg %p138
        %p519 = pneg %p135
        %p520 = pneg %p159
        %p521 = pneg %p156
        %p522 = pneg %p180
        %p523 = pneg %p177
        %p524 = pneg %p201
        %p525 = pneg %p198
        %p526 = pneg %p222
        %p527 = pneg %p219
        %p528 = pneg %p243
        %p529 = pneg %p240
        %p530 = pneg %p264
        %p531 = pneg %p261
        %p532 = pneg %p285
        %p533 = pneg %p282
        %p534 = pneg %p306
        %p535 = pneg %p303
        %p536 = pneg %p332
        %p537 = pneg %p329
        %s538 = sand.u32 %s319, 1
        %s539 = scalar_lea.sflag [#allocation4], %s538
        %s540 = sand.u32 %s319, 1
        %s541 = smul.addr %s540, 16
        %s542 = scalar_lea.vmem [#allocation14], %s541
        %v543 = vld [vmem:[%s476] sm:$0xff]
        %v544 = vld [vmem:[#allocation5] sm:$0xff]
        %v545 = vld [vmem:[#allocation5 + $0x8] sm:$0xff]
        %v546 = vld [vmem:[#allocation5 + $0x10] sm:$0xff]
        %v547 = vld [vmem:[#allocation5 + $0x18] sm:$0xff]
        %v548 = vld [vmem:[#allocation5 + $0x20] sm:$0xff]
        %v549 = vld [vmem:[#allocation5 + $0x28] sm:$0xff]
        %v550 = vld [vmem:[#allocation5 + $0x30] sm:$0xff]
        %v551 = vld [vmem:[#allocation5 + $0x38] sm:$0xff]
        %v552 = vld [vmem:[#allocation5 + $0x40] sm:$0xff]
        %v553 = vld [vmem:[#allocation5 + $0x48] sm:$0xff]
        %v554 = vld [vmem:[#allocation5 + $0x50] sm:$0xff]
        %v555 = vld [vmem:[#allocation5 + $0x58] sm:$0xff]
        %v556 = vld [vmem:[#allocation5 + $0x60] sm:$0xff]
        %v557 = vld [vmem:[#allocation5 + $0x68] sm:$0xff]
        %v558 = vld [vmem:[#allocation5 + $0x70] sm:$0xff]
        %v559 = vld [vmem:[#allocation5 + $0x78] sm:$0xff]
        %v560 = vld [vmem:[%s2] sm:$0x1]
        %v562 = vlaneseq
        %v563 = vshrl.u32 %v562, 7
        %v564 = vsub.s32 0, %v563
        %v565 = vrot.slane %v560, %v564
        %567 = vmatprep.subr.mxu0 0.0
        %568 = vmatpush1.msra.mxu0 %v544
        %569 = vmatprep.subr.mxu0 0.0
        %570 = vmatpush1.msra.mxu0 %v545
        %571 = vmatprep.subr.mxu0 0.0
        %572 = vmatpush1.msra.mxu0 %v546
        %573 = vmatprep.subr.mxu0 0.0
        %574 = vmatpush1.msra.mxu0 %v547
        %575 = vmatprep.subr.mxu0 0.0
        %576 = vmatpush1.msra.mxu0 %v548
        %577 = vmatprep.subr.mxu0 0.0
        %578 = vmatpush1.msra.mxu0 %v549
        %579 = vmatprep.subr.mxu0 0.0
        %580 = vmatpush1.msra.mxu0 %v550
        %581 = vmatprep.subr.mxu0 0.0
        %582 = vmatpush1.msra.mxu0 %v551
        %583 = vmatprep.subr.mxu0 0.0
        %584 = vmatpush1.msra.mxu0 %v552
        %585 = vmatprep.subr.mxu0 0.0
        %586 = vmatpush1.msra.mxu0 %v553
        %587 = vmatprep.subr.mxu0 0.0
        %588 = vmatpush1.msra.mxu0 %v554
        %589 = vmatprep.subr.mxu0 0.0
        %590 = vmatpush1.msra.mxu0 %v555
        %591 = vmatprep.subr.mxu0 0.0
        %592 = vmatpush1.msra.mxu0 %v556
        %593 = vmatprep.subr.mxu0 0.0
        %594 = vmatpush1.msra.mxu0 %v557
        %595 = vmatprep.subr.mxu0 0.0
        %596 = vmatpush1.msra.mxu0 %v558
        %597 = vmatprep.subr.mxu0 0.0
        %598 = vmatpush1.msra.mxu0 %v559
        %599 = vmatprep.subr.mxu0 0.0
        %600 = vmatpush1.msra.mxu0 0.0
        %601 = vmatprep.subr.mxu0 0.0
        %602 = vmatpush1.msra.mxu0 0.0
        %603 = vmatprep.subr.mxu0 0.0
        %604 = vmatpush1.msra.mxu0 0.0
        %605 = vmatprep.subr.mxu0 0.0
        %606 = vmatpush1.msra.mxu0 0.0
        %607 = vmatprep.subr.mxu0 0.0
        %608 = vmatpush1.msra.mxu0 0.0
        %609 = vmatprep.subr.mxu0 0.0
        %610 = vmatpush1.msra.mxu0 0.0
        %611 = vmatprep.subr.mxu0 0.0
        %612 = vmatpush1.msra.mxu0 0.0
        %613 = vmatprep.subr.mxu0 0.0
        %614 = vmatpush1.msra.mxu0 0.0
        %615 = vmatprep.subr.mxu0 0.0
        %616 = vmatpush1.msra.mxu0 0.0
        %617 = vmatprep.subr.mxu0 0.0
        %618 = vmatpush1.msra.mxu0 0.0
        %619 = vmatprep.subr.mxu0 0.0
        %620 = vmatpush1.msra.mxu0 0.0
        %621 = vmatprep.subr.mxu0 0.0
        %622 = vmatpush1.msra.mxu0 0.0
        %623 = vmatprep.subr.mxu0 0.0
        %624 = vmatpush1.msra.mxu0 0.0
        %625 = vmatprep.subr.mxu0 0.0
        %626 = vmatpush1.msra.mxu0 0.0
        %627 = vmatprep.subr.mxu0 0.0
        %628 = vmatpush1.msra.mxu0 0.0
        %629 = vmatprep.subr.mxu0 0.0
        %630 = vmatpush1.msra.mxu0 0.0
        %631 = vmatprep.mubr.f32.mxu0 0.0
        %632 = vmatmul.mubr.f32.gmra.mrb[0].mxu0 %v543
        %v633 = vpop.f32.mrb[0].mxu0
        %v634 = vadd.f32 %v565, %v633
        %v635 = vpop.f32.mrb[0].mxu0
        %636 = vdwg.mxu0
        %v637 = vmax.f32 %v634, 0.0
        %v638 = vld [vmem:[#allocation7] sm:$0xff]
        %v639 = vld [vmem:[#allocation7 + $0x8] sm:$0xff]
        %v640 = vld [vmem:[#allocation7 + $0x10] sm:$0xff]
        %v641 = vld [vmem:[#allocation7 + $0x18] sm:$0xff]
        %v642 = vld [vmem:[#allocation7 + $0x20] sm:$0xff]
        %v643 = vld [vmem:[#allocation7 + $0x28] sm:$0xff]
        %v644 = vld [vmem:[#allocation7 + $0x30] sm:$0xff]
        %v645 = vld [vmem:[#allocation7 + $0x38] sm:$0xff]
        %v646 = vld [vmem:[#allocation7 + $0x40] sm:$0xff]
        %v647 = vld [vmem:[#allocation7 + $0x48] sm:$0xff]
        %v648 = vld [vmem:[#allocation7 + $0x50] sm:$0xff]
        %v649 = vld [vmem:[#allocation7 + $0x58] sm:$0xff]
        %v650 = vld [vmem:[#allocation7 + $0x60] sm:$0xff]
        %v651 = vld [vmem:[#allocation7 + $0x68] sm:$0xff]
        %v652 = vld [vmem:[#allocation7 + $0x70] sm:$0xff]
        %v653 = vld [vmem:[#allocation7 + $0x78] sm:$0xff]
        %v654 = vld [vmem:[%s4] sm:$0x1]
        %v656 = vlaneseq
        %v657 = vshrl.u32 %v656, 7
        %v658 = vsub.s32 0, %v657
        %v659 = vrot.slane %v654, %v658
        %661 = vmatprep.subr.mxu0 0.0
        %662 = vmatpush1.msra.mxu0 %v638
        %663 = vmatprep.subr.mxu0 0.0
        %664 = vmatpush1.msra.mxu0 %v639
        %665 = vmatprep.subr.mxu0 0.0
        %666 = vmatpush1.msra.mxu0 %v640
        %667 = vmatprep.subr.mxu0 0.0
        %668 = vmatpush1.msra.mxu0 %v641
        %669 = vmatprep.subr.mxu0 0.0
        %670 = vmatpush1.msra.mxu0 %v642
        %671 = vmatprep.subr.mxu0 0.0
        %672 = vmatpush1.msra.mxu0 %v643
        %673 = vmatprep.subr.mxu0 0.0
        %674 = vmatpush1.msra.mxu0 %v644
        %675 = vmatprep.subr.mxu0 0.0
        %676 = vmatpush1.msra.mxu0 %v645
        %677 = vmatprep.subr.mxu0 0.0
        %678 = vmatpush1.msra.mxu0 %v646
        %679 = vmatprep.subr.mxu0 0.0
        %680 = vmatpush1.msra.mxu0 %v647
        %681 = vmatprep.subr.mxu0 0.0
        %682 = vmatpush1.msra.mxu0 %v648
        %683 = vmatprep.subr.mxu0 0.0
        %684 = vmatpush1.msra.mxu0 %v649
        %685 = vmatprep.subr.mxu0 0.0
        %686 = vmatpush1.msra.mxu0 %v650
        %687 = vmatprep.subr.mxu0 0.0
        %688 = vmatpush1.msra.mxu0 %v651
        %689 = vmatprep.subr.mxu0 0.0
        %690 = vmatpush1.msra.mxu0 %v652
        %691 = vmatprep.subr.mxu0 0.0
        %692 = vmatpush1.msra.mxu0 %v653
        %693 = vmatprep.subr.mxu0 0.0
        %694 = vmatpush1.msra.mxu0 0.0
        %695 = vmatprep.subr.mxu0 0.0
        %696 = vmatpush1.msra.mxu0 0.0
        %697 = vmatprep.subr.mxu0 0.0
        %698 = vmatpush1.msra.mxu0 0.0
        %699 = vmatprep.subr.mxu0 0.0
        %700 = vmatpush1.msra.mxu0 0.0
        %701 = vmatprep.subr.mxu0 0.0
        %702 = vmatpush1.msra.mxu0 0.0
        %703 = vmatprep.subr.mxu0 0.0
        %704 = vmatpush1.msra.mxu0 0.0
        %705 = vmatprep.subr.mxu0 0.0
        %706 = vmatpush1.msra.mxu0 0.0
        %707 = vmatprep.subr.mxu0 0.0
        %708 = vmatpush1.msra.mxu0 0.0
        %709 = vmatprep.subr.mxu0 0.0
        %710 = vmatpush1.msra.mxu0 0.0
        %711 = vmatprep.subr.mxu0 0.0
        %712 = vmatpush1.msra.mxu0 0.0
        %713 = vmatprep.subr.mxu0 0.0
        %714 = vmatpush1.msra.mxu0 0.0
        %715 = vmatprep.subr.mxu0 0.0
        %716 = vmatpush1.msra.mxu0 0.0
        %717 = vmatprep.subr.mxu0 0.0
        %718 = vmatpush1.msra.mxu0 0.0
        %719 = vmatprep.subr.mxu0 0.0
        %720 = vmatpush1.msra.mxu0 0.0
        %721 = vmatprep.subr.mxu0 0.0
        %722 = vmatpush1.msra.mxu0 0.0
        %723 = vmatprep.subr.mxu0 0.0
        %724 = vmatpush1.msra.mxu0 0.0
        %725 = vmatprep.mubr.f32.mxu0 0.0
        %726 = vmatmul.mubr.f32.gmra.mrb[0].mxu0 %v637
        %v727 = vpop.f32.mrb[0].mxu0
        %v728 = vadd.f32 %v659, %v727
        %v729 = vpop.f32.mrb[0].mxu0
        %730 = vdwg.mxu0
        %v731 = vmax.f32 %v728, 0.0
        %v732 = vld [vmem:[#allocation8] sm:$0xff]
        %v733 = vld [vmem:[#allocation8 + $0x8] sm:$0xff]
        %v734 = vld [vmem:[#allocation8 + $0x10] sm:$0xff]
        %v735 = vld [vmem:[#allocation8 + $0x18] sm:$0xff]
        %v736 = vld [vmem:[#allocation8 + $0x20] sm:$0xff]
        %v737 = vld [vmem:[#allocation8 + $0x28] sm:$0xff]
        %v738 = vld [vmem:[#allocation8 + $0x30] sm:$0xff]
        %v739 = vld [vmem:[#allocation8 + $0x38] sm:$0xff]
        %v740 = vld [vmem:[#allocation8 + $0x40] sm:$0xff]
        %v741 = vld [vmem:[#allocation8 + $0x48] sm:$0xff]
        %v742 = vld [vmem:[#allocation8 + $0x50] sm:$0xff]
        %v743 = vld [vmem:[#allocation8 + $0x58] sm:$0xff]
        %v744 = vld [vmem:[#allocation8 + $0x60] sm:$0xff]
        %v745 = vld [vmem:[#allocation8 + $0x68] sm:$0xff]
        %v746 = vld [vmem:[#allocation8 + $0x70] sm:$0xff]
        %v747 = vld [vmem:[#allocation8 + $0x78] sm:$0xff]
        %v748 = vld [vmem:[%s6] sm:$0x1]
        %v750 = vlaneseq
        %v751 = vshrl.u32 %v750, 7
        %v752 = vsub.s32 0, %v751
        %v753 = vrot.slane %v748, %v752
        %755 = vmatprep.subr.mxu0 0.0
        %756 = vmatpush1.msra.mxu0 %v732
        %757 = vmatprep.subr.mxu0 0.0
        %758 = vmatpush1.msra.mxu0 %v733
        %759 = vmatprep.subr.mxu0 0.0
        %760 = vmatpush1.msra.mxu0 %v734
        %761 = vmatprep.subr.mxu0 0.0
        %762 = vmatpush1.msra.mxu0 %v735
        %763 = vmatprep.subr.mxu0 0.0
        %764 = vmatpush1.msra.mxu0 %v736
        %765 = vmatprep.subr.mxu0 0.0
        %766 = vmatpush1.msra.mxu0 %v737
        %767 = vmatprep.subr.mxu0 0.0
        %768 = vmatpush1.msra.mxu0 %v738
        %769 = vmatprep.subr.mxu0 0.0
        %770 = vmatpush1.msra.mxu0 %v739
        %771 = vmatprep.subr.mxu0 0.0
        %772 = vmatpush1.msra.mxu0 %v740
        %773 = vmatprep.subr.mxu0 0.0
        %774 = vmatpush1.msra.mxu0 %v741
        %775 = vmatprep.subr.mxu0 0.0
        %776 = vmatpush1.msra.mxu0 %v742
        %777 = vmatprep.subr.mxu0 0.0
        %778 = vmatpush1.msra.mxu0 %v743
        %779 = vmatprep.subr.mxu0 0.0
        %780 = vmatpush1.msra.mxu0 %v744
        %781 = vmatprep.subr.mxu0 0.0
        %782 = vmatpush1.msra.mxu0 %v745
        %783 = vmatprep.subr.mxu0 0.0
        %784 = vmatpush1.msra.mxu0 %v746
        %785 = vmatprep.subr.mxu0 0.0
        %786 = vmatpush1.msra.mxu0 %v747
        %787 = vmatprep.subr.mxu0 0.0
        %788 = vmatpush1.msra.mxu0 0.0
        %789 = vmatprep.subr.mxu0 0.0
        %790 = vmatpush1.msra.mxu0 0.0
        %791 = vmatprep.subr.mxu0 0.0
        %792 = vmatpush1.msra.mxu0 0.0
        %793 = vmatprep.subr.mxu0 0.0
        %794 = vmatpush1.msra.mxu0 0.0
        %795 = vmatprep.subr.mxu0 0.0
        %796 = vmatpush1.msra.mxu0 0.0
        %797 = vmatprep.subr.mxu0 0.0
        %798 = vmatpush1.msra.mxu0 0.0
        %799 = vmatprep.subr.mxu0 0.0
        %800 = vmatpush1.msra.mxu0 0.0
        %801 = vmatprep.subr.mxu0 0.0
        %802 = vmatpush1.msra.mxu0 0.0
        %803 = vmatprep.subr.mxu0 0.0
        %804 = vmatpush1.msra.mxu0 0.0
        %805 = vmatprep.subr.mxu0 0.0
        %806 = vmatpush1.msra.mxu0 0.0
        %807 = vmatprep.subr.mxu0 0.0
        %808 = vmatpush1.msra.mxu0 0.0
        %809 = vmatprep.subr.mxu0 0.0
        %810 = vmatpush1.msra.mxu0 0.0
        %811 = vmatprep.subr.mxu0 0.0
        %812 = vmatpush1.msra.mxu0 0.0
        %813 = vmatprep.subr.mxu0 0.0
        %814 = vmatpush1.msra.mxu0 0.0
        %815 = vmatprep.subr.mxu0 0.0
        %816 = vmatpush1.msra.mxu0 0.0
        %817 = vmatprep.subr.mxu0 0.0
        %818 = vmatpush1.msra.mxu0 0.0
        %819 = vmatprep.mubr.f32.mxu0 0.0
        %820 = vmatmul.mubr.f32.gmra.mrb[0].mxu0 %v731
        %v821 = vpop.f32.mrb[0].mxu0
        %v822 = vadd.f32 %v753, %v821
        %v823 = vpop.f32.mrb[0].mxu0
        %824 = vdwg.mxu0
        %v825 = vld [vmem:[#allocation10] sm:$0xff]
        %v826 = vld [vmem:[#allocation10 + $0x8] sm:$0xff]
        %v827 = vld [vmem:[#allocation10 + $0x10] sm:$0xff]
        %v828 = vld [vmem:[#allocation10 + $0x18] sm:$0xff]
        %v829 = vld [vmem:[#allocation10 + $0x20] sm:$0xff]
        %v830 = vld [vmem:[#allocation10 + $0x28] sm:$0xff]
        %v831 = vld [vmem:[#allocation10 + $0x30] sm:$0xff]
        %v832 = vld [vmem:[#allocation10 + $0x38] sm:$0xff]
        %v833 = vld [vmem:[#allocation10 + $0x40] sm:$0xff]
        %v834 = vld [vmem:[#allocation10 + $0x48] sm:$0xff]
        %v835 = vld [vmem:[#allocation10 + $0x50] sm:$0xff]
        %v836 = vld [vmem:[#allocation10 + $0x58] sm:$0xff]
        %v837 = vld [vmem:[#allocation10 + $0x60] sm:$0xff]
        %v838 = vld [vmem:[#allocation10 + $0x68] sm:$0xff]
        %v839 = vld [vmem:[#allocation10 + $0x70] sm:$0xff]
        %v840 = vld [vmem:[#allocation10 + $0x78] sm:$0xff]
        %v841 = vld [vmem:[%s8] sm:$0x1]
        %v843 = vlaneseq
        %v844 = vshrl.u32 %v843, 7
        %v845 = vsub.s32 0, %v844
        %v846 = vrot.slane %v841, %v845
        %848 = vmatprep.subr.mxu0 0.0
        %849 = vmatpush1.msra.mxu0 %v825
        %850 = vmatprep.subr.mxu0 0.0
        %851 = vmatpush1.msra.mxu0 %v826
        %852 = vmatprep.subr.mxu0 0.0
        %853 = vmatpush1.msra.mxu0 %v827
        %854 = vmatprep.subr.mxu0 0.0
        %855 = vmatpush1.msra.mxu0 %v828
        %856 = vmatprep.subr.mxu0 0.0
        %857 = vmatpush1.msra.mxu0 %v829
        %858 = vmatprep.subr.mxu0 0.0
        %859 = vmatpush1.msra.mxu0 %v830
        %860 = vmatprep.subr.mxu0 0.0
        %861 = vmatpush1.msra.mxu0 %v831
        %862 = vmatprep.subr.mxu0 0.0
        %863 = vmatpush1.msra.mxu0 %v832
        %864 = vmatprep.subr.mxu0 0.0
        %865 = vmatpush1.msra.mxu0 %v833
        %866 = vmatprep.subr.mxu0 0.0
        %867 = vmatpush1.msra.mxu0 %v834
        %868 = vmatprep.subr.mxu0 0.0
        %869 = vmatpush1.msra.mxu0 %v835
        %870 = vmatprep.subr.mxu0 0.0
        %871 = vmatpush1.msra.mxu0 %v836
        %872 = vmatprep.subr.mxu0 0.0
        %873 = vmatpush1.msra.mxu0 %v837
        %874 = vmatprep.subr.mxu0 0.0
        %875 = vmatpush1.msra.mxu0 %v838
        %876 = vmatprep.subr.mxu0 0.0
        %877 = vmatpush1.msra.mxu0 %v839
        %878 = vmatprep.subr.mxu0 0.0
        %879 = vmatpush1.msra.mxu0 %v840
        %880 = vmatprep.subr.mxu0 0.0
        %881 = vmatpush1.msra.mxu0 0.0
        %882 = vmatprep.subr.mxu0 0.0
        %883 = vmatpush1.msra.mxu0 0.0
        %884 = vmatprep.subr.mxu0 0.0
        %885 = vmatpush1.msra.mxu0 0.0
        %886 = vmatprep.subr.mxu0 0.0
        %887 = vmatpush1.msra.mxu0 0.0
        %888 = vmatprep.subr.mxu0 0.0
        %889 = vmatpush1.msra.mxu0 0.0
        %890 = vmatprep.subr.mxu0 0.0
        %891 = vmatpush1.msra.mxu0 0.0
        %892 = vmatprep.subr.mxu0 0.0
        %893 = vmatpush1.msra.mxu0 0.0
        %894 = vmatprep.subr.mxu0 0.0
        %895 = vmatpush1.msra.mxu0 0.0
        %896 = vmatprep.subr.mxu0 0.0
        %897 = vmatpush1.msra.mxu0 0.0
        %898 = vmatprep.subr.mxu0 0.0
        %899 = vmatpush1.msra.mxu0 0.0
        %900 = vmatprep.subr.mxu0 0.0
        %901 = vmatpush1.msra.mxu0 0.0
        %902 = vmatprep.subr.mxu0 0.0
        %903 = vmatpush1.msra.mxu0 0.0
        %904 = vmatprep.subr.mxu0 0.0
        %905 = vmatpush1.msra.mxu0 0.0
        %906 = vmatprep.subr.mxu0 0.0
        %907 = vmatpush1.msra.mxu0 0.0
        %908 = vmatprep.subr.mxu0 0.0
        %909 = vmatpush1.msra.mxu0 0.0
        %910 = vmatprep.subr.mxu0 0.0
        %911 = vmatpush1.msra.mxu0 0.0
        %912 = vmatprep.mubr.f32.mxu0 0.0
        %913 = vmatmul.mubr.f32.gmra.mrb[0].mxu0 %v822
        %v914 = vpop.f32.mrb[0].mxu0
        %v915 = vadd.f32 %v846, %v914
        %v916 = vpop.f32.mrb[0].mxu0
        %917 = vdwg.mxu0
        %v918 = vmax.f32 %v915, 0.0
        %v919 = vld [vmem:[#allocation11] sm:$0xff]
        %v920 = vld [vmem:[#allocation11 + $0x8] sm:$0xff]
        %v921 = vld [vmem:[#allocation11 + $0x10] sm:$0xff]
        %v922 = vld [vmem:[#allocation11 + $0x18] sm:$0xff]
        %v923 = vld [vmem:[#allocation11 + $0x20] sm:$0xff]
        %v924 = vld [vmem:[#allocation11 + $0x28] sm:$0xff]
        %v925 = vld [vmem:[#allocation11 + $0x30] sm:$0xff]
        %v926 = vld [vmem:[#allocation11 + $0x38] sm:$0xff]
        %v927 = vld [vmem:[#allocation11 + $0x40] sm:$0xff]
        %v928 = vld [vmem:[#allocation11 + $0x48] sm:$0xff]
        %v929 = vld [vmem:[#allocation11 + $0x50] sm:$0xff]
        %v930 = vld [vmem:[#allocation11 + $0x58] sm:$0xff]
        %v931 = vld [vmem:[#allocation11 + $0x60] sm:$0xff]
        %v932 = vld [vmem:[#allocation11 + $0x68] sm:$0xff]
        %v933 = vld [vmem:[#allocation11 + $0x70] sm:$0xff]
        %v934 = vld [vmem:[#allocation11 + $0x78] sm:$0xff]
        %v935 = vld [vmem:[%s10] sm:$0x1]
        %v937 = vlaneseq
        %v938 = vshrl.u32 %v937, 7
        %v939 = vsub.s32 0, %v938
        %v940 = vrot.slane %v935, %v939
        %942 = vmatprep.subr.mxu0 0.0
        %943 = vmatpush1.msra.mxu0 %v919
        %944 = vmatprep.subr.mxu0 0.0
        %945 = vmatpush1.msra.mxu0 %v920
        %946 = vmatprep.subr.mxu0 0.0
        %947 = vmatpush1.msra.mxu0 %v921
        %948 = vmatprep.subr.mxu0 0.0
        %949 = vmatpush1.msra.mxu0 %v922
        %950 = vmatprep.subr.mxu0 0.0
        %951 = vmatpush1.msra.mxu0 %v923
        %952 = vmatprep.subr.mxu0 0.0
        %953 = vmatpush1.msra.mxu0 %v924
        %954 = vmatprep.subr.mxu0 0.0
        %955 = vmatpush1.msra.mxu0 %v925
        %956 = vmatprep.subr.mxu0 0.0
        %957 = vmatpush1.msra.mxu0 %v926
        %958 = vmatprep.subr.mxu0 0.0
        %959 = vmatpush1.msra.mxu0 %v927
        %960 = vmatprep.subr.mxu0 0.0
        %961 = vmatpush1.msra.mxu0 %v928
        %962 = vmatprep.subr.mxu0 0.0
        %963 = vmatpush1.msra.mxu0 %v929
        %964 = vmatprep.subr.mxu0 0.0
        %965 = vmatpush1.msra.mxu0 %v930
        %966 = vmatprep.subr.mxu0 0.0
        %967 = vmatpush1.msra.mxu0 %v931
        %968 = vmatprep.subr.mxu0 0.0
        %969 = vmatpush1.msra.mxu0 %v932
        %970 = vmatprep.subr.mxu0 0.0
        %971 = vmatpush1.msra.mxu0 %v933
        %972 = vmatprep.subr.mxu0 0.0
        %973 = vmatpush1.msra.mxu0 %v934
        %974 = vmatprep.subr.mxu0 0.0
        %975 = vmatpush1.msra.mxu0 0.0
        %976 = vmatprep.subr.mxu0 0.0
        %977 = vmatpush1.msra.mxu0 0.0
        %978 = vmatprep.subr.mxu0 0.0
        %979 = vmatpush1.msra.mxu0 0.0
        %980 = vmatprep.subr.mxu0 0.0
        %981 = vmatpush1.msra.mxu0 0.0
        %982 = vmatprep.subr.mxu0 0.0
        %983 = vmatpush1.msra.mxu0 0.0
        %984 = vmatprep.subr.mxu0 0.0
        %985 = vmatpush1.msra.mxu0 0.0
        %986 = vmatprep.subr.mxu0 0.0
        %987 = vmatpush1.msra.mxu0 0.0
        %988 = vmatprep.subr.mxu0 0.0
        %989 = vmatpush1.msra.mxu0 0.0
        %990 = vmatprep.subr.mxu0 0.0
        %991 = vmatpush1.msra.mxu0 0.0
        %992 = vmatprep.subr.mxu0 0.0
        %993 = vmatpush1.msra.mxu0 0.0
        %994 = vmatprep.subr.mxu0 0.0
        %995 = vmatpush1.msra.mxu0 0.0
        %996 = vmatprep.subr.mxu0 0.0
        %997 = vmatpush1.msra.mxu0 0.0
        %998 = vmatprep.subr.mxu0 0.0
        %999 = vmatpush1.msra.mxu0 0.0
        %1000 = vmatprep.subr.mxu0 0.0
        %1001 = vmatpush1.msra.mxu0 0.0
        %1002 = vmatprep.subr.mxu0 0.0
        %1003 = vmatpush1.msra.mxu0 0.0
        %1004 = vmatprep.subr.mxu0 0.0
        %1005 = vmatpush1.msra.mxu0 0.0
        %1006 = vmatprep.mubr.f32.mxu0 0.0
        %1007 = vmatmul.mubr.f32.gmra.mrb[0].mxu0 %v918
        %v1008 = vpop.f32.mrb[0].mxu0
        %v1009 = vadd.f32 %v940, %v1008
        %v1010 = vpop.f32.mrb[0].mxu0
        %1011 = vdwg.mxu0
        %v1012 = vmax.f32 %v1009, 0.0
        %v1013 = vld [vmem:[#allocation13] sm:$0xff]
        %v1014 = vld [vmem:[#allocation13 + $0x8] sm:$0xff]
        %v1015 = vld [vmem:[#allocation13 + $0x10] sm:$0xff]
        %v1016 = vld [vmem:[#allocation13 + $0x18] sm:$0xff]
        %v1017 = vld [vmem:[#allocation13 + $0x20] sm:$0xff]
        %v1018 = vld [vmem:[#allocation13 + $0x28] sm:$0xff]
        %v1019 = vld [vmem:[#allocation13 + $0x30] sm:$0xff]
        %v1020 = vld [vmem:[#allocation13 + $0x38] sm:$0xff]
        %v1021 = vld [vmem:[#allocation13 + $0x40] sm:$0xff]
        %v1022 = vld [vmem:[#allocation13 + $0x48] sm:$0xff]
        %v1023 = vld [vmem:[#allocation13 + $0x50] sm:$0xff]
        %v1024 = vld [vmem:[#allocation13 + $0x58] sm:$0xff]
        %v1025 = vld [vmem:[#allocation13 + $0x60] sm:$0xff]
        %v1026 = vld [vmem:[#allocation13 + $0x68] sm:$0xff]
        %v1027 = vld [vmem:[#allocation13 + $0x70] sm:$0xff]
        %v1028 = vld [vmem:[#allocation13 + $0x78] sm:$0xff]
        %v1029 = vld [vmem:[%s12] sm:$0x1]
        %v1031 = vlaneseq
        %v1032 = vshrl.u32 %v1031, 7
        %v1033 = vsub.s32 0, %v1032
        %v1034 = vrot.slane %v1029, %v1033
        %1036 = vmatprep.subr.mxu0 0.0
        %1037 = vmatpush1.msra.mxu0 %v1013
        %1038 = vmatprep.subr.mxu0 0.0
        %1039 = vmatpush1.msra.mxu0 %v1014
        %1040 = vmatprep.subr.mxu0 0.0
        %1041 = vmatpush1.msra.mxu0 %v1015
        %1042 = vmatprep.subr.mxu0 0.0
        %1043 = vmatpush1.msra.mxu0 %v1016
        %1044 = vmatprep.subr.mxu0 0.0
        %1045 = vmatpush1.msra.mxu0 %v1017
        %1046 = vmatprep.subr.mxu0 0.0
        %1047 = vmatpush1.msra.mxu0 %v1018
        %1048 = vmatprep.subr.mxu0 0.0
        %1049 = vmatpush1.msra.mxu0 %v1019
        %1050 = vmatprep.subr.mxu0 0.0
        %1051 = vmatpush1.msra.mxu0 %v1020
        %1052 = vmatprep.subr.mxu0 0.0
        %1053 = vmatpush1.msra.mxu0 %v1021
        %1054 = vmatprep.subr.mxu0 0.0
        %1055 = vmatpush1.msra.mxu0 %v1022
        %1056 = vmatprep.subr.mxu0 0.0
        %1057 = vmatpush1.msra.mxu0 %v1023
        %1058 = vmatprep.subr.mxu0 0.0
        %1059 = vmatpush1.msra.mxu0 %v1024
        %1060 = vmatprep.subr.mxu0 0.0
        %1061 = vmatpush1.msra.mxu0 %v1025
        %1062 = vmatprep.subr.mxu0 0.0
        %1063 = vmatpush1.msra.mxu0 %v1026
        %1064 = vmatprep.subr.mxu0 0.0
        %1065 = vmatpush1.msra.mxu0 %v1027
        %1066 = vmatprep.subr.mxu0 0.0
        %1067 = vmatpush1.msra.mxu0 %v1028
        %1068 = vmatprep.subr.mxu0 0.0
        %1069 = vmatpush1.msra.mxu0 0.0
        %1070 = vmatprep.subr.mxu0 0.0
        %1071 = vmatpush1.msra.mxu0 0.0
        %1072 = vmatprep.subr.mxu0 0.0
        %1073 = vmatpush1.msra.mxu0 0.0
        %1074 = vmatprep.subr.mxu0 0.0
        %1075 = vmatpush1.msra.mxu0 0.0
        %1076 = vmatprep.subr.mxu0 0.0
        %1077 = vmatpush1.msra.mxu0 0.0
        %1078 = vmatprep.subr.mxu0 0.0
        %1079 = vmatpush1.msra.mxu0 0.0
        %1080 = vmatprep.subr.mxu0 0.0
        %1081 = vmatpush1.msra.mxu0 0.0
        %1082 = vmatprep.subr.mxu0 0.0
        %1083 = vmatpush1.msra.mxu0 0.0
        %1084 = vmatprep.subr.mxu0 0.0
        %1085 = vmatpush1.msra.mxu0 0.0
        %1086 = vmatprep.subr.mxu0 0.0
        %1087 = vmatpush1.msra.mxu0 0.0
        %1088 = vmatprep.subr.mxu0 0.0
        %1089 = vmatpush1.msra.mxu0 0.0
        %1090 = vmatprep.subr.mxu0 0.0
        %1091 = vmatpush1.msra.mxu0 0.0
        %1092 = vmatprep.subr.mxu0 0.0
        %1093 = vmatpush1.msra.mxu0 0.0
        %1094 = vmatprep.subr.mxu0 0.0
        %1095 = vmatpush1.msra.mxu0 0.0
        %1096 = vmatprep.subr.mxu0 0.0
        %1097 = vmatpush1.msra.mxu0 0.0
        %1098 = vmatprep.subr.mxu0 0.0
        %1099 = vmatpush1.msra.mxu0 0.0
        %1100 = vmatprep.mubr.f32.mxu0 0.0
        %1101 = vmatmul.mubr.f32.gmra.mrb[0].mxu0 %v1012
        %v1102 = vpop.f32.mrb[0].mxu0
        %v1103 = vadd.f32 %v1034, %v1102
        %v1104 = vpop.f32.mrb[0].mxu0
        %1105 = vdwg.mxu0
        %1106 = vst [vmem:[%s542] sm:$0xff] %v1103
        %1107 = vst [vmem:[%s542 + $0x8] sm:$0xff] %v822
        %s1108 = sand.u32 %s319, 1
        %s1109 = scalar_lea.sflag [#allocation4], %s1108
        %s1110 = sand.u32 %s319, 1
        %s1111 = smul.addr %s1110, 16
        %s1112 = scalar_lea.vmem [#allocation14], %s1111
        // Predicated region
        $region101: #{tpu_custom_call.1} parent=71 // pred_check
          %p1113 = pneg %p329
        $region102: #{tpu_custom_call.1} parent=71 // pred_check_branch
          %1115 = sbr.rel (%p1113) target = $region104
        $region103: #{tpu_custom_call.1} parent=71 // pred_region
          %s1117 = ssub.s32 256, 256
          %1118 = vsyncadd %s1109, %s1117
          %s1119 = smul.addr %s33, 2
          %s1120 = smul.addr %s1119, 128
          %s1121 = scalar_lea.hbm %s13, %s1120
          %s1123 = sshll.u32 %s1112, 4
          %s1124 = int_to_ptr.vmem [resolvable:$true] %s1123
          %1126 = dma.vmem_to_hbm [thread:$0]  %s1124, 256, %s1121, %s1109
        $region104: #{tpu_custom_call.1} parent=71 // pred_fallthru
          _
      $region72: #{tpu_custom_call.1} parent=5 // pred_fallthru
        _
      %p1127 = scmp.le.s32.totalorder 2, %s28
      // Predicated region
      $region105: #{tpu_custom_call.1} parent=5 // pred_check
        %p1128 = pneg %p1127
      $region106: #{tpu_custom_call.1} parent=5 // pred_check_branch
        %1130 = sbr.rel (%p1128) target = $region108
      $region107: #{tpu_custom_call.1} parent=5 // pred_region
        %s1131 = ssub.s32 %s28, 2
        // Predicated region
        $region109: #{tpu_custom_call.1} parent=107 // pred_check
          %p1132 = pneg %p335
        $region110: #{tpu_custom_call.1} parent=107 // pred_check_branch
          %1134 = sbr.rel (%p1132) target = $region112
        $region111: #{tpu_custom_call.1} parent=107 // pred_region
          %s1135 = sand.u32 %s320, 1
          %s1136 = scalar_lea.sflag [#allocation4], %s1135
          %s1137 = sand.u32 %s320, 1
          %s1138 = smul.addr %s1137, 16
          %s1139 = scalar_lea.vmem [#allocation14], %s1138
          %1140 = dma.done %s1136, 256
        $region112: #{tpu_custom_call.1} parent=107 // pred_fallthru
          _
      $region108: #{tpu_custom_call.1} parent=5 // pred_fallthru
        _
    $region6: #{tpu_custom_call.1} parent=1 // loop_footer
      %s32 = sadd.s32 1, %s28
    $region7: #{tpu_custom_call.1} parent=1 // loop_footer_branch
      %27 = sbr.rel target = $region3
    $region8: #{tpu_custom_call.1} parent=1 // loop_exit
      _
    %1141 = vsyncpa [#allocation3], 1
    %s1142 = scalar_lea.sflag [#allocation3], 1
    %1143 = vsyncpa %s1142, 1
    %1144 = vsyncpa [#allocation6], 1
    %1145 = vsyncpa [#allocation9], 1
    %1146 = vsyncpa [#allocation12], 1
    %1147 = vsyncpa [#allocation4], 1
    %s1148 = scalar_lea.sflag [#allocation4], 1
    %1149 = vsyncpa %s1148, 1

</llo_original>
